<compile_context>
chip_gen: v7x
topology: tpu7x:2x2x1
jax: 0.10.0
libtpu: 0.0.40
codegen_flags: <defaults>
</compile_context>

<pallas_src>
import jax
import jax.numpy as jnp
from jax import lax
from jax.experimental import pallas as pl
from jax.experimental.pallas import tpu as pltpu

IGNORE_INDEX = 255
SMOOTH = 1.0          # DiceLoss(smooth=1.0)
MAX_TILE_P = 16384    # lanes per pixel tile (multiple of 128), ~1-3 MiB/block


def _make_kernel(num_classes, tile_p, hw, needs_mask):
    """Build the per-tile kernel (static shapes captured in the closure)."""

    def kernel(tmin_ref, logits_ref, tgt_ref, out_ref):
        # tmin_ref:   (1,) int32 in SMEM (scalar prefetch: dice ignore remap value)
        # logits_ref: (1, C, tile_p) input dtype (f32 or bf16)
        # tgt_ref:    (1, 1, tile_p) int32
        # out_ref:    (1, 1, 1, 128) f32 -> lanes [0,1,2] = ce_sum, n_valid, inter
        logits = logits_ref[0].astype(jnp.float32)          # (C, tile_p)
        tgt = tgt_ref[0]                                     # (1, tile_p) int32

        valid = tgt != IGNORE_INDEX                          # (1, tile_p) bool
        if needs_mask:
            # Last pixel tile is partial: mask out-of-bounds lanes.
            lane = lax.broadcasted_iota(jnp.int32, (1, tile_p), 1)
            pos = pl.program_id(1) * tile_p + lane
            inb = pos < hw
            logits = jnp.where(inb, logits, 0.0)
            valid = jnp.logical_and(valid, inb)

        # Numerically-stable softmax statistics over the class (sublane) axis.
        m = jnp.max(logits, axis=0, keepdims=True)           # (1, tile_p)
        sh = logits - m                                      # (C, tile_p)
        ex = jnp.exp(sh)                                     # (C, tile_p)  (single exp)
        denom = jnp.sum(ex, axis=0, keepdims=True)           # (1, tile_p)
        log_denom = jnp.log(denom)                           # (1, tile_p)  (single log)
        inv_denom = pl.reciprocal(denom)                     # (1, tile_p)

        cls = lax.broadcasted_iota(jnp.int32, (num_classes, tile_p), 0)

        # --- CrossEntropy (ignore_index masked; mean applied in the wrapper) ---
        ce_tgt = jnp.where(valid, tgt, 0)                    # safe class for ignored px
        tgt_sh = jnp.sum(jnp.where(cls == ce_tgt, sh, 0.0),
                         axis=0, keepdims=True)              # shifted logit at target
        nll = log_denom - tgt_sh                             # -log_softmax[target]
        ce_part = jnp.sum(jnp.where(valid, nll, 0.0))
        nvalid_part = jnp.sum(valid.astype(jnp.float32))

        # --- Dice intersection: softmax prob at the (remapped) target class ---
        # Matches reference: ignore_index pixels remapped to target.min().
        dice_tgt = jnp.where(tgt == IGNORE_INDEX, tmin_ref[0], tgt)
        sel = jnp.sum(jnp.where(cls == dice_tgt, ex, 0.0),
                      axis=0, keepdims=True)
        p_t = sel * inv_denom                                # (1, tile_p)
        if needs_mask:
            p_t = jnp.where(inb, p_t, 0.0)
        inter_part = jnp.sum(p_t)

        # Lane-pack the three partial sums into one (1, 128) output row.
        lanes = lax.broadcasted_iota(jnp.int32, (1, 128), 1)
        row = jnp.where(lanes == 0, ce_part,
              jnp.where(lanes == 1, nvalid_part,
              jnp.where(lanes == 2, inter_part, 0.0)))
        out_ref[0, 0] = row

    return kernel


def ce_dice_loss(output, target):
    """output: (N, C, H, W) logits (f32 or bf16); target: (N, H, W) int labels."""
    N, C, H, W = output.shape
    HW = H * W
    P = N * HW

    # Free reshapes only -- no transpose, no one-hot in HBM.
    logits = output.reshape(N, C, HW)
    tgt = target.reshape(N, 1, HW).astype(jnp.int32)
    # Dice remap value for ignore_index pixels (target.min(), as in the reference).
    tmin = jnp.min(tgt).reshape(1)

    tile_p = HW if HW <= MAX_TILE_P else MAX_TILE_P
    num_t = (HW + tile_p - 1) // tile_p
    needs_mask = (HW % tile_p) != 0

    kernel = _make_kernel(C, tile_p, HW, needs_mask)

    grid_spec = pltpu.PrefetchScalarGridSpec(
        num_scalar_prefetch=1,
        grid=(N, num_t),
        in_specs=[
            pl.BlockSpec((1, C, tile_p), lambda n, t, tmin_ref: (n, 0, t)),
            pl.BlockSpec((1, 1, tile_p), lambda n, t, tmin_ref: (n, 0, t)),
        ],
        out_specs=pl.BlockSpec((1, 1, 1, 128), lambda n, t, tmin_ref: (n, t, 0, 0)),
    )

    parts = pl.pallas_call(
        kernel,
        out_shape=jax.ShapeDtypeStruct((N, num_t, 1, 128), jnp.float32),
        grid_spec=grid_spec,
        compiler_params=pltpu.CompilerParams(
            dimension_semantics=("parallel", "parallel"),
            vmem_limit_bytes=48 * 1024 * 1024,  # headroom under v7x's 64 MiB VMEM
        ),
    )(tmin, logits, tgt)

    # Tiny scalar finalization on the per-tile partial sums.
    ce_sum = jnp.sum(parts[:, :, 0, 0])
    n_valid = jnp.sum(parts[:, :, 0, 1])
    inter = jnp.sum(parts[:, :, 0, 2])

    ce_loss = ce_sum / jnp.maximum(n_valid, 1.0)  # guard all-ignored case (torch -> nan)
    # Exact identities: sum(softmax) == sum(one_hot) == P, so denominators are constant.
    dice_loss = 1.0 - (2.0 * inter + SMOOTH) / (2.0 * float(P) + SMOOTH)
    return ce_loss + dice_loss


if __name__ == "__main__":
    key = jax.random.PRNGKey(0)
    k1, k2 = jax.random.split(key)

    N, C, H, W = 2, 4, 16, 16
    logits = jax.random.normal(k1, (N, C, H, W), dtype=jnp.float32)
    target = jax.random.randint(k2, (N, H, W), 0, C, dtype=jnp.int32)
    # A couple of ignore_index pixels to exercise CE masking + dice remap.
    target = target.at[0, 0, 0].set(IGNORE_INDEX)
    target = target.at[1, 3, 7].set(IGNORE_INDEX)

    loss = ce_dice_loss(logits, target)
    jax.block_until_ready(loss)
    print("KERNEL_OK")
</pallas_src>

<mosaic_0001>
module attributes {stable_mosaic.version = 11 : i64} {
  func.func @kernel(%arg0: i32, %arg1: i32, %arg2: memref<1xi32, #tpu.memory_space<smem>>, %arg3: memref<1x4x256xf32, #tpu.memory_space<vmem>>, %arg4: memref<1x1x256xi32, #tpu.memory_space<vmem>>, %arg5: memref<1x1x1x128xf32, #tpu.memory_space<vmem>>) attributes {dimension_semantics = [#tpu.dimension_semantics<parallel>, #tpu.dimension_semantics<parallel>], iteration_bounds = array<i64: 2, 1>, scalar_prefetch = 1 : i64, scratch_operands = 0 : i64, tpu.core_type = #tpu.core_type<tc>, window_params = [{transform_indices = @transform_0, window_bounds = array<i64: 1, 4, 256>}, {transform_indices = @transform_1, window_bounds = array<i64: 1, 1, 256>}, {transform_indices = @transform_2, window_bounds = array<i64: 1, 1, 1, 128>}]} {
    %c0 = arith.constant 0 : index
    %c0_0 = arith.constant 0 : index
    %c0_1 = arith.constant 0 : index
    %0 = vector.load %arg3[%c0, %c0_0, %c0_1] : memref<1x4x256xf32, #tpu.memory_space<vmem>>, vector<1x4x256xf32>
    %1 = vector.shape_cast %0 : vector<1x4x256xf32> to vector<4x256xf32>
    %c0_2 = arith.constant 0 : index
    %c0_3 = arith.constant 0 : index
    %c0_4 = arith.constant 0 : index
    %2 = vector.load %arg4[%c0_2, %c0_3, %c0_4] : memref<1x1x256xi32, #tpu.memory_space<vmem>>, vector<1x1x256xi32>
    %3 = vector.shape_cast %2 : vector<1x1x256xi32> to vector<1x256xi32>
    %c255_i32 = arith.constant 255 : i32
    %4 = vector.broadcast %c255_i32 : i32 to vector<1x256xi32>
    %5 = arith.cmpi ne, %3, %4 : vector<1x256xi32>
    %cst = arith.constant dense<0xFF800000> : vector<256xf32>
    %6 = vector.multi_reduction <maximumf>, %1, %cst [0] : vector<4x256xf32> to vector<256xf32>
    %7 = vector.shape_cast %6 : vector<256xf32> to vector<1x256xf32>
    %8 = vector.broadcast %7 : vector<1x256xf32> to vector<4x256xf32>
    %9 = arith.subf %1, %8 : vector<4x256xf32>
    %10 = math.exp %9 : vector<4x256xf32>
    %cst_5 = arith.constant dense<0.000000e+00> : vector<256xf32>
    %11 = vector.multi_reduction <add>, %10, %cst_5 [0] : vector<4x256xf32> to vector<256xf32>
    %12 = vector.shape_cast %11 : vector<256xf32> to vector<1x256xf32>
    %13 = math.log %12 : vector<1x256xf32>
    %14 = tpu.reciprocal %12 : vector<1x256xf32> -> vector<1x256xf32>
    %15 = tpu.iota {dimensions = array<i32: 0>} : vector<4x256xi32>
    %c0_i32 = arith.constant 0 : i32
    %16 = vector.broadcast %c0_i32 : i32 to vector<1x256xi32>
    %17 = arith.select %5, %3, %16 : vector<1x256xi1>, vector<1x256xi32>
    %18 = vector.broadcast %17 : vector<1x256xi32> to vector<4x256xi32>
    %19 = arith.cmpi eq, %15, %18 : vector<4x256xi32>
    %cst_6 = arith.constant 0.000000e+00 : f32
    %20 = vector.broadcast %cst_6 : f32 to vector<4x256xf32>
    %21 = arith.select %19, %9, %20 : vector<4x256xi1>, vector<4x256xf32>
    %cst_7 = arith.constant dense<0.000000e+00> : vector<256xf32>
    %22 = vector.multi_reduction <add>, %21, %cst_7 [0] : vector<4x256xf32> to vector<256xf32>
    %23 = vector.shape_cast %22 : vector<256xf32> to vector<1x256xf32>
    %24 = arith.subf %13, %23 : vector<1x256xf32>
    %cst_8 = arith.constant 0.000000e+00 : f32
    %25 = vector.broadcast %cst_8 : f32 to vector<1x256xf32>
    %26 = arith.select %5, %24, %25 : vector<1x256xi1>, vector<1x256xf32>
    %27 = vector.shape_cast %26 : vector<1x256xf32> to vector<1x1x256xf32>
    %cst_9 = arith.constant dense<0.000000e+00> : vector<1xf32>
    %28 = vector.multi_reduction <add>, %27, %cst_9 [1, 2] : vector<1x1x256xf32> to vector<1xf32>
    %29 = vector.shape_cast %28 : vector<1xf32> to vector<1x1x1xf32>
    %30 = vector.extract %29[0, 0, 0] : f32 from vector<1x1x1xf32>
    %31 = arith.extui %5 : vector<1x256xi1> to vector<1x256xi32>
    %32 = arith.sitofp %31 : vector<1x256xi32> to vector<1x256xf32>
    %33 = vector.shape_cast %32 : vector<1x256xf32> to vector<1x1x256xf32>
    %cst_10 = arith.constant dense<0.000000e+00> : vector<1xf32>
    %34 = vector.multi_reduction <add>, %33, %cst_10 [1, 2] : vector<1x1x256xf32> to vector<1xf32>
    %35 = vector.shape_cast %34 : vector<1xf32> to vector<1x1x1xf32>
    %36 = vector.extract %35[0, 0, 0] : f32 from vector<1x1x1xf32>
    %c255_i32_11 = arith.constant 255 : i32
    %37 = vector.broadcast %c255_i32_11 : i32 to vector<1x256xi32>
    %38 = arith.cmpi eq, %3, %37 : vector<1x256xi32>
    %c0_12 = arith.constant 0 : index
    %39 = memref.load %arg2[%c0_12] : memref<1xi32, #tpu.memory_space<smem>>
    %40 = vector.broadcast %39 : i32 to vector<1x256xi32>
    %41 = arith.select %38, %40, %3 : vector<1x256xi1>, vector<1x256xi32>
    %42 = vector.broadcast %41 : vector<1x256xi32> to vector<4x256xi32>
    %43 = arith.cmpi eq, %15, %42 : vector<4x256xi32>
    %cst_13 = arith.constant 0.000000e+00 : f32
    %44 = vector.broadcast %cst_13 : f32 to vector<4x256xf32>
    %45 = arith.select %43, %10, %44 : vector<4x256xi1>, vector<4x256xf32>
    %cst_14 = arith.constant dense<0.000000e+00> : vector<256xf32>
    %46 = vector.multi_reduction <add>, %45, %cst_14 [0] : vector<4x256xf32> to vector<256xf32>
    %47 = vector.shape_cast %46 : vector<256xf32> to vector<1x256xf32>
    %48 = arith.mulf %47, %14 : vector<1x256xf32>
    %49 = vector.shape_cast %48 : vector<1x256xf32> to vector<1x1x256xf32>
    %cst_15 = arith.constant dense<0.000000e+00> : vector<1xf32>
    %50 = vector.multi_reduction <add>, %49, %cst_15 [1, 2] : vector<1x1x256xf32> to vector<1xf32>
    %51 = vector.shape_cast %50 : vector<1xf32> to vector<1x1x1xf32>
    %52 = vector.extract %51[0, 0, 0] : f32 from vector<1x1x1xf32>
    %53 = tpu.iota {dimensions = array<i32: 1>} : vector<1x128xi32>
    %c0_i32_16 = arith.constant 0 : i32
    %54 = vector.broadcast %c0_i32_16 : i32 to vector<1x128xi32>
    %55 = arith.cmpi eq, %53, %54 : vector<1x128xi32>
    %c1_i32 = arith.constant 1 : i32
    %56 = vector.broadcast %c1_i32 : i32 to vector<1x128xi32>
    %57 = arith.cmpi eq, %53, %56 : vector<1x128xi32>
    %c2_i32 = arith.constant 2 : i32
    %58 = vector.broadcast %c2_i32 : i32 to vector<1x128xi32>
    %59 = arith.cmpi eq, %53, %58 : vector<1x128xi32>
    %cst_17 = arith.constant 0.000000e+00 : f32
    %60 = vector.broadcast %52 : f32 to vector<1x128xf32>
    %61 = vector.broadcast %cst_17 : f32 to vector<1x128xf32>
    %62 = arith.select %59, %60, %61 : vector<1x128xi1>, vector<1x128xf32>
    %63 = vector.broadcast %36 : f32 to vector<1x128xf32>
    %64 = arith.select %57, %63, %62 : vector<1x128xi1>, vector<1x128xf32>
    %65 = vector.broadcast %30 : f32 to vector<1x128xf32>
    %66 = arith.select %55, %65, %64 : vector<1x128xi1>, vector<1x128xf32>
    %c0_18 = arith.constant 0 : index
    %c0_19 = arith.constant 0 : index
    %c0_20 = arith.constant 0 : index
    %c0_21 = arith.constant 0 : index
    %67 = vector.load %arg5[%c0_18, %c0_19, %c0_20, %c0_21] : memref<1x1x1x128xf32, #tpu.memory_space<vmem>>, vector<1x1x1x128xf32>
    %68 = vector.shape_cast %67 : vector<1x1x1x128xf32> to vector<1x128xf32>
    %69 = vector.shape_cast %66 : vector<1x128xf32> to vector<1x1x1x128xf32>
    tpu.vector_store %arg5[%c0_18, %c0_19, %c0_20, %c0_21], %69 {strides = array<i32>} : memref<1x1x1x128xf32, #tpu.memory_space<vmem>>, vector<1x1x1x128xf32>,
    return
  }
  func.func @transform_0(%arg0: i32, %arg1: i32, %arg2: memref<1xi32, #tpu.memory_space<smem>>) -> (i32, i32, i32) {
    %c0_i32 = arith.constant 0 : i32
    %c0_i32_0 = arith.constant 0 : i32
    return %arg0, %c0_i32, %arg1 : i32, i32, i32
  }
  func.func @transform_1(%arg0: i32, %arg1: i32, %arg2: memref<1xi32, #tpu.memory_space<smem>>) -> (i32, i32, i32) {
    %c0_i32 = arith.constant 0 : i32
    %c0_i32_0 = arith.constant 0 : i32
    return %arg0, %c0_i32, %arg1 : i32, i32, i32
  }
  func.func @transform_2(%arg0: i32, %arg1: i32, %arg2: memref<1xi32, #tpu.memory_space<smem>>) -> (i32, i32, i32, i32) {
    %c0_i32 = arith.constant 0 : i32
    %c0_i32_0 = arith.constant 0 : i32
    %c0_i32_1 = arith.constant 0 : i32
    return %arg0, %arg1, %c0_i32, %c0_i32_0 : i32, i32, i32, i32
  }
}

</mosaic_0001>

<llo_original>
// kernel: tpu_custom_call.1
$region0: #{tpu_custom_call.1}
  #allocation0 [shape = 'u32[]', space=smem, size = 0x4, offset = 0x4, fixed_abs, tag = 'smem constant byte address 0x4 - core index']
  #allocation1 [shape = 'u32[144,128]{1,0:T(1,128)}', space=vmem, size = 0x12000, scoped, tag = 'internal scratch']
  #allocation2 [shape = 's32[1]{0}', space=sflag, size = 0x4, scoped, tag = 'scoped memory for tpu_custom_call.1']
  #allocation3 [shape = 's32[1]{0:T(128)S(6)}', space=smem, size = 0x200, scoped, tag = 'prefetched SMEM operand 0']
  %s0 = inlined_call_operand.<no memory space> [shape: s32[1], index: 0, kind: input, shape index: {}]
  %s1 = inlined_call_operand.hbm [shape: f32[2,4,256], index: 1, kind: input, shape index: {}]
  %s2 = inlined_call_operand.vmem [shape: s32[2,1,256], index: 2, kind: input, shape index: {}]
  %s3 = inlined_call_operand.hbm [shape: f32[2,1,1,128], index: 3, kind: output, shape index: {}]
  %s4 = sld [smem:[#allocation0]]
  $region45: #{tpu_custom_call.1} parent=0
    _
  %s6 = ssub.s32 1, %s4
  %s7 = scalar_select 0, %s6, %s4
  %8 = sst [smem:[#allocation3]] %s0
  $region1: #{tpu_custom_call.1} parent=0
    #allocation4 [shape = 'u8[8192]{0}', space=vmem, size = 0x2000, scoped, tag = 'input window, operand 1']
    #allocation5 [shape = 's32[2]{0}', space=sflag, size = 0x8, scoped, tag = 'scoped memory for tpu_custom_call.1']
    #allocation6 [shape = 's32[2]{0}', space=sflag, size = 0x8, scoped, tag = 'scoped memory for tpu_custom_call.1']
    #allocation7 [shape = 'u8[1024]{0}', space=vmem, size = 0x400, scoped, tag = 'output window, operand 0']
    %9 = vsyncpa [#allocation5], 0
    %s10 = scalar_lea.sflag [#allocation5], 1
    %11 = vsyncpa %s10, 0
    %12 = vsyncpa [#allocation6], 0
    %s13 = scalar_lea.sflag [#allocation6], 1
    %14 = vsyncpa %s13, 0
    loop: start=0, step=1, limit=4
    $region2: #{tpu_custom_call.1} parent=1 // loop_pre_header
      _
    $region3: #{tpu_custom_call.1} parent=1 // loop_header
      %s16 = sphi 0, %s20
      %p17 = scmp.ge.s32.totalorder %s16, 4
      %s23 = sphi 0, %s35
      %s24 = sphi 0, %s31
      %s25 = sphi 0, %s23
      %s26 = sphi 0, %s24
      %s27 = sphi 0, %s25
      %s28 = sphi 0, %s26
      %s40 = sphi 0, %s42
      %s43 = sphi 0, %s40
      %s44 = sphi 0, %s43
      %s60 = sphi 0, %s44
      %s68 = sphi 0, %s70
      %s71 = sphi 0, %s68
      %s72 = sphi 0, %s71
      %s88 = sphi 0, %s72
      %s96 = sphi 0, %s98
      %s99 = sphi 0, %s96
      %s100 = sphi 0, %s99
      %s116 = sphi 0, %s100
    $region4: #{tpu_custom_call.1} parent=1 // loop_header_branch
      %19 = sbr.rel (%p17) target = $region8
    $region5: #{tpu_custom_call.1} parent=1 // loop_body
      %s21 = ssub.s32 %s16, 1
      %s22 = ssub.s32 %s16, 2
      %s29 = sadd.s32 1, %s24
      %p30 = scmp.ge.s32.totalorder %s29, 1
      %s31 = scalar_select %p30, 0, %s29
      %s32 = sadd.s32 1, %s23
      %s33 = scalar_select %p30, %s32, %s23
      %p34 = scmp.ge.s32.totalorder %s33, 2
      %s35 = scalar_select %p34, 0, %s33
      %s36 = ssub.s32 %s23, %s35
      %s37 = ssub.s32 %s24, %s31
      %s38 = sor.u32 %s36, %s37
      %p39 = scmp.eq.s32.totalorder %s38, 0
      %s41 = sadd.s32 %s40, 1
      %s42 = scalar_select %p39, %s40, %s41
      %p45 = pneg %p39
      %p46 = scmp.eq.s32.totalorder %s16, 1
      %p47 = por %p45, %p46
      %p48 = scmp.ne.s32.totalorder %s40, %s43
      %p49 = scmp.eq.s32.totalorder %s16, 0
      %p50 = por %p48, %p49
      %p51 = scmp.ne.s32.totalorder %s40, %s43
      %p52 = scmp.eq.s32.totalorder %s21, 1
      %p53 = por %p51, %p52
      %p54 = scmp.ne.s32.totalorder %s43, %s44
      %p55 = scmp.eq.s32.totalorder %s21, 0
      %p56 = por %p54, %p55
      %p57 = scmp.ne.s32.totalorder %s43, %s44
      %p58 = scmp.eq.s32.totalorder %s22, 1
      %p59 = por %p57, %p58
      %p61 = scmp.ne.s32.totalorder %s44, %s60
      %p62 = scmp.eq.s32.totalorder %s22, 0
      %p63 = por %p61, %p62
      %s64 = ssub.s32 %s23, %s35
      %s65 = ssub.s32 %s24, %s31
      %s66 = sor.u32 %s64, %s65
      %p67 = scmp.eq.s32.totalorder %s66, 0
      %s69 = sadd.s32 %s68, 1
      %s70 = scalar_select %p67, %s68, %s69
      %p73 = pneg %p67
      %p74 = scmp.eq.s32.totalorder %s16, 1
      %p75 = por %p73, %p74
      %p76 = scmp.ne.s32.totalorder %s68, %s71
      %p77 = scmp.eq.s32.totalorder %s16, 0
      %p78 = por %p76, %p77
      %p79 = scmp.ne.s32.totalorder %s68, %s71
      %p80 = scmp.eq.s32.totalorder %s21, 1
      %p81 = por %p79, %p80
      %p82 = scmp.ne.s32.totalorder %s71, %s72
      %p83 = scmp.eq.s32.totalorder %s21, 0
      %p84 = por %p82, %p83
      %p85 = scmp.ne.s32.totalorder %s71, %s72
      %p86 = scmp.eq.s32.totalorder %s22, 1
      %p87 = por %p85, %p86
      %p89 = scmp.ne.s32.totalorder %s72, %s88
      %p90 = scmp.eq.s32.totalorder %s22, 0
      %p91 = por %p89, %p90
      %s92 = ssub.s32 %s23, %s35
      %s93 = ssub.s32 %s24, %s31
      %s94 = sor.u32 %s92, %s93
      %p95 = scmp.eq.s32.totalorder %s94, 0
      %s97 = sadd.s32 %s96, 1
      %s98 = scalar_select %p95, %s96, %s97
      %p101 = pneg %p95
      %p102 = scmp.eq.s32.totalorder %s16, 1
      %p103 = por %p101, %p102
      %p104 = scmp.ne.s32.totalorder %s96, %s99
      %p105 = scmp.eq.s32.totalorder %s16, 0
      %p106 = por %p104, %p105
      %p107 = scmp.ne.s32.totalorder %s96, %s99
      %p108 = scmp.eq.s32.totalorder %s21, 1
      %p109 = por %p107, %p108
      %p110 = scmp.ne.s32.totalorder %s99, %s100
      %p111 = scmp.eq.s32.totalorder %s21, 0
      %p112 = por %p110, %p111
      %p113 = scmp.ne.s32.totalorder %s99, %s100
      %p114 = scmp.eq.s32.totalorder %s22, 1
      %p115 = por %p113, %p114
      %p117 = scmp.ne.s32.totalorder %s100, %s116
      %p118 = scmp.eq.s32.totalorder %s22, 0
      %p119 = por %p117, %p118
      %p120 = scmp.le.s32.totalorder 1, %s16
      %p121 = scmp.lt.s32.totalorder %s16, 3
      %p122 = pnand %p120, %p121
      %p123 = pneg %p122
      // Predicated region
      $region9: #{tpu_custom_call.1} parent=5 // pred_check
        _
      $region10: #{tpu_custom_call.1} parent=5 // pred_check_branch
        %125 = sbr.rel (%p122) target = $region12
      $region11: #{tpu_custom_call.1} parent=5 // pred_region
        %s126 = ssub.s32 %s16, 1
      $region12: #{tpu_custom_call.1} parent=5 // pred_fallthru
        _
      %p127 = scmp.lt.s32.totalorder %s16, 2
      // Predicated region
      $region13: #{tpu_custom_call.1} parent=5 // pred_check
        %p128 = pneg %p127
      $region14: #{tpu_custom_call.1} parent=5 // pred_check_branch
        %130 = sbr.rel (%p128) target = $region16
      $region15: #{tpu_custom_call.1} parent=5 // pred_region
        // Predicated region
        $region17: #{tpu_custom_call.1} parent=15 // pred_check
          %p131 = pneg %p50
        $region18: #{tpu_custom_call.1} parent=15 // pred_check_branch
          %133 = sbr.rel (%p131) target = $region20
        $region19: #{tpu_custom_call.1} parent=15 // pred_region
          %s134 = sand.u32 %s40, 1
          %s135 = scalar_lea.sflag [#allocation5], %s134
          %s136 = sand.u32 %s40, 1
          %s137 = smul.addr %s136, 8
          %s138 = scalar_lea.vmem [#allocation4], %s137
          %s139 = smul.u32 2, %s24
          %s141 = ssub.s32 128, 128
          %142 = vsyncadd %s135, %s141
          %s143 = smul.addr %s23, 2
          %s144 = sadd.s32 %s139, %s143
          %s145 = smul.addr %s144, 64
          %s146 = scalar_lea.hbm %s1, %s145
          %s148 = sshll.u32 %s138, 4
          %s149 = int_to_ptr.vmem [resolvable:$true] %s148
          %151 = dma.hbm_to_vmem [thread:$0]  %s146, 128, %s149, %s135
        $region20: #{tpu_custom_call.1} parent=15 // pred_fallthru
          _
        // Predicated region
        $region21: #{tpu_custom_call.1} parent=15 // pred_check
          %p152 = pneg %p78
        $region22: #{tpu_custom_call.1} parent=15 // pred_check_branch
          %154 = sbr.rel (%p152) target = $region24
        $region23: #{tpu_custom_call.1} parent=15 // pred_region
          %s155 = smul.u32 2, %s24
          %p156 = scmp.lt.s32.totalorder %s23, 1
          %s157 = scalar_select %p156, %s23, 1
          %p158 = scmp.lt.s32.totalorder %s155, 1
          %s159 = scalar_select %p158, %s155, 1
          %s160 = smul.addr %s157, 2
          %s161 = sadd.s32 %s159, %s160
          %s162 = scalar_lea.vmem %s2, %s161
          %s163 = smul.u32 2, %s24
        $region24: #{tpu_custom_call.1} parent=15 // pred_fallthru
          _
      $region16: #{tpu_custom_call.1} parent=5 // pred_fallthru
        _
      %p164 = scmp.le.s32.totalorder 1, %s16
      %p165 = scmp.lt.s32.totalorder %s16, 3
      %p166 = pnand %p164, %p165
      %p167 = pneg %p166
      // Predicated region
      $region25: #{tpu_custom_call.1} parent=5 // pred_check
        _
      $region26: #{tpu_custom_call.1} parent=5 // pred_check_branch
        %169 = sbr.rel (%p166) target = $region28
      $region27: #{tpu_custom_call.1} parent=5 // pred_region
        %s170 = ssub.s32 %s16, 1
        %s171 = sand.u32 %s43, 1
        %s172 = scalar_lea.sflag [#allocation5], %s171
        %s173 = sand.u32 %s43, 1
        %s174 = smul.addr %s173, 8
        %s175 = scalar_lea.vmem [#allocation4], %s174
        // Predicated region
        $region29: #{tpu_custom_call.1} parent=27 // pred_check
          %p176 = pneg %p56
        $region30: #{tpu_custom_call.1} parent=27 // pred_check_branch
          %178 = sbr.rel (%p176) target = $region32
        $region31: #{tpu_custom_call.1} parent=27 // pred_region
          %179 = dma.done %s172, 128
        $region32: #{tpu_custom_call.1} parent=27 // pred_fallthru
          _
        %s180 = sand.u32 %s43, 1
        %s181 = scalar_lea.sflag [#allocation5], %s180
        %s182 = sand.u32 %s43, 1
        %s183 = smul.addr %s182, 8
        %s184 = scalar_lea.vmem [#allocation4], %s183
        %p185 = pneg %p56
        %p186 = pneg %p53
        %s187 = smul.u32 2, %s26
        %p188 = scmp.lt.s32.totalorder %s25, 1
        %s189 = scalar_select %p188, %s25, 1
        %p190 = scmp.lt.s32.totalorder %s187, 1
        %s191 = scalar_select %p190, %s187, 1
        %s192 = smul.addr %s189, 2
        %s193 = sadd.s32 %s191, %s192
        %s194 = scalar_lea.vmem %s2, %s193
        %p195 = pneg %p84
        %p196 = pneg %p81
        %p197 = pneg %p112
        %p198 = pneg %p109
        %s199 = sand.u32 %s99, 1
        %s200 = scalar_lea.sflag [#allocation6], %s199
        %s201 = sand.u32 %s99, 1
        %s202 = scalar_lea.vmem [#allocation7], %s201
        %s203 = smul.u32 2, %s26
        %s204 = smul.u32 2, %s26
        %p205 = scmp.lt.s32.totalorder %s25, 1
        %s206 = scalar_select %p205, %s25, 1
        %p207 = scmp.lt.s32.totalorder %s204, 1
        %s208 = scalar_select %p207, %s204, 1
        %s209 = smul.addr %s206, 2
        %s210 = sadd.s32 %s208, %s209
        %s211 = scalar_lea.vmem %s2, %s210
        %s212 = smul.u32 2, %s26
        %v213 = vld [vmem:[%s175] sm:$0xff]
        %v214 = vld [vmem:[%s211] sm:$0x3]
        %vm215 = vcmp.ne.s32.totalorder %v214, 255
        %v217 = vcombine.high %v213, %v213
        %vm219 = vcmask 1043456
        %v220 = vsel %vm219, %v213, -inf
        %v221 = vrot.slane %v220, 4
        %v222 = vmax.f32 %v220, %v221
        %v223 = vrot.slane %v222, 2
        %v224 = vmax.f32 %v222, %v223
        %v225 = vrot.slane %v224, 1
        %v226 = vmax.f32 %v224, %v225
        %v227 = vsel %vm219, %v217, -inf
        %v228 = vrot.slane %v227, 4
        %v229 = vmax.f32 %v227, %v228
        %v230 = vrot.slane %v229, 2
        %v231 = vmax.f32 %v229, %v230
        %v232 = vrot.slane %v231, 1
        %v233 = vmax.f32 %v231, %v232
        %v236 = vcombine.low %v226, %v233
        %v238 = vsub.f32 %v213, %v236
        %v239 = vmul.f32 %v238, 1.442695
        %v240 = vpow.pop %v239
        %v242 = vcombine.high %v240, %v240
        %v244 = vsel %vm219, %v240, 0.0
        %v245 = vrot.slane %v244, 4
        %v246 = vadd.f32 %v244, %v245
        %v247 = vrot.slane %v246, 2
        %v248 = vadd.f32 %v246, %v247
        %v249 = vrot.slane %v248, 1
        %v250 = vadd.f32 %v248, %v249
        %v251 = vsel %vm219, %v242, 0.0
        %v252 = vrot.slane %v251, 4
        %v253 = vadd.f32 %v251, %v252
        %v254 = vrot.slane %v253, 2
        %v255 = vadd.f32 %v253, %v254
        %v256 = vrot.slane %v255, 1
        %v257 = vadd.f32 %v255, %v256
        %v258 = vlog2.pop %v250
        %v259 = vmul.f32 %v258, 0.6931472
        %v260 = vlog2.pop %v257
        %v261 = vmul.f32 %v260, 0.6931472
        %v262 = vrcp.pop %v250
        %v263 = vrcp.pop %v257
        %v264 = vlaneseq
        %v265 = vshrl.u32 %v264, 7
        %v266 = vsel %vm215, %v214, 0
        %v267 = vlaneseq
        %v268 = vshrl.u32 %v267, 7
        %v269 = vsub.s32 0, %v268
        %v270 = vrot.slane %v266, %v269
        %v271 = vlaneseq
        %v272 = vshrl.u32 %v271, 7
        %v273 = vsub.s32 1, %v272
        %v274 = vrot.slane %v266, %v273
        %vm275 = vcmp.eq.s32.totalorder %v265, %v270
        %vm276 = vcmp.eq.s32.totalorder %v265, %v274
        %v278 = vcombine.high %v238, %v238
        %v280 = vsel %vm275, %v238, 0.0
        %v281 = vsel %vm276, %v278, 0.0
        %v282 = vsel %vm219, %v280, 0.0
        %v283 = vrot.slane %v282, 4
        %v284 = vadd.f32 %v282, %v283
        %v285 = vrot.slane %v284, 2
        %v286 = vadd.f32 %v284, %v285
        %v287 = vrot.slane %v286, 1
        %v288 = vadd.f32 %v286, %v287
        %v289 = vsel %vm219, %v281, 0.0
        %v290 = vrot.slane %v289, 4
        %v291 = vadd.f32 %v289, %v290
        %v292 = vrot.slane %v291, 2
        %v293 = vadd.f32 %v291, %v292
        %v294 = vrot.slane %v293, 1
        %v295 = vadd.f32 %v293, %v294
        %v296 = vsub.f32 %v259, %v288
        %v297 = vsub.f32 %v261, %v295
        %v300 = vcombine.low %v296, %v297
        %v302 = vunpack.c.l.s4 1966171168
        %v303 = vunpack.c.0.s8 %v302
        %v304 = vlaneseq
        %v305 = vshrl.u32 %v304, 7
        %v306 = vsub.s32 %v303, %v305
        %v307 = vrot.slane %v300, %v306
        %v309 = vunpack.c.l.s4 1966171168
        %v310 = vunpack.c.0.s8 %v309
        %v311 = vlaneseq
        %v312 = vshrl.u32 %v311, 7
        %v313 = vsub.s32 %v310, %v312
        %v314 = vrot.slane %v307, %v313
        %v316 = vsel %vm215, %v314, 0.0
        %v318 = vlaneseq
        %v319 = vshrl.u32 %v318, 7
        %v320 = vsub.s32 0, %v319
        %v321 = vrot.slane %v316, %v320
        %v322 = vlaneseq
        %v323 = vshrl.u32 %v322, 7
        %v324 = vsub.s32 1, %v323
        %v325 = vrot.slane %v316, %v324
        %vm328 = vcmask 1040384
        %v329 = vsel %vm328, %v321, 0.0
        %v330 = vsel %vm328, %v325, 0.0
        %v331 = vadd.f32 %v329, %v330
        %332 = vadd.xlane.f32.xlu0 %v331
        %v333 = vpop.xlane.xlu0 %332
        %v334 = vrot.slane %v333, 4
        %v335 = vadd.f32 %v333, %v334
        %v336 = vrot.slane %v335, 2
        %v337 = vadd.f32 %v335, %v336
        %v338 = vrot.slane %v337, 1
        %v339 = vadd.f32 %v337, %v338
        %s340 = vtos %v339
        %v341 = vsel %vm215, 1, 0
        %v342 = vcvt.s32.f32 %v341
        %v344 = vlaneseq
        %v345 = vshrl.u32 %v344, 7
        %v346 = vsub.s32 0, %v345
        %v347 = vrot.slane %v342, %v346
        %v348 = vlaneseq
        %v349 = vshrl.u32 %v348, 7
        %v350 = vsub.s32 1, %v349
        %v351 = vrot.slane %v342, %v350
        %v354 = vsel %vm328, %v347, 0.0
        %v355 = vsel %vm328, %v351, 0.0
        %v356 = vadd.f32 %v354, %v355
        %357 = vadd.xlane.f32.xlu0 %v356
        %v358 = vpop.xlane.xlu0 %357
        %v359 = vrot.slane %v358, 4
        %v360 = vadd.f32 %v358, %v359
        %v361 = vrot.slane %v360, 2
        %v362 = vadd.f32 %v360, %v361
        %v363 = vrot.slane %v362, 1
        %v364 = vadd.f32 %v362, %v363
        %s365 = vtos %v364
        %vm366 = vcmp.eq.s32.totalorder %v214, 255
        %s367 = sld [smem:[#allocation3]]
        %v368 = vstv %s367
        %v369 = vsel %vm366, %v368, %v214
        %v370 = vlaneseq
        %v371 = vshrl.u32 %v370, 7
        %v372 = vsub.s32 0, %v371
        %v373 = vrot.slane %v369, %v372
        %v374 = vlaneseq
        %v375 = vshrl.u32 %v374, 7
        %v376 = vsub.s32 1, %v375
        %v377 = vrot.slane %v369, %v376
        %vm378 = vcmp.eq.s32.totalorder %v265, %v373
        %vm379 = vcmp.eq.s32.totalorder %v265, %v377
        %v380 = vsel %vm378, %v240, 0.0
        %v381 = vsel %vm379, %v242, 0.0
        %v382 = vsel %vm219, %v380, 0.0
        %v383 = vrot.slane %v382, 4
        %v384 = vadd.f32 %v382, %v383
        %v385 = vrot.slane %v384, 2
        %v386 = vadd.f32 %v384, %v385
        %v387 = vrot.slane %v386, 1
        %v388 = vadd.f32 %v386, %v387
        %v389 = vsel %vm219, %v381, 0.0
        %v390 = vrot.slane %v389, 4
        %v391 = vadd.f32 %v389, %v390
        %v392 = vrot.slane %v391, 2
        %v393 = vadd.f32 %v391, %v392
        %v394 = vrot.slane %v393, 1
        %v395 = vadd.f32 %v393, %v394
        %v396 = vmul.f32 %v388, %v262
        %v397 = vmul.f32 %v395, %v263
        %v398 = vsel %vm328, %v396, 0.0
        %v399 = vsel %vm328, %v397, 0.0
        %v400 = vadd.f32 %v398, %v399
        %401 = vadd.xlane.f32.xlu0 %v400
        %v402 = vpop.xlane.xlu0 %401
        %v403 = vrot.slane %v402, 4
        %v404 = vadd.f32 %v402, %v403
        %v405 = vrot.slane %v404, 2
        %v406 = vadd.f32 %v404, %v405
        %v407 = vrot.slane %v406, 1
        %v408 = vadd.f32 %v406, %v407
        %s409 = vtos %v408
        %v410 = vlaneseq
        %v411 = vand.u32 %v410, 127
        %vm412 = vcmp.eq.s32.totalorder %v411, 0
        %vm413 = vcmp.eq.s32.totalorder %v411, 1
        %vm414 = vcmp.eq.s32.totalorder %v411, 2
        %v415 = vstv %s409
        %v416 = vsel %vm414, %v415, 0.0
        %v417 = vstv %s365
        %v418 = vsel %vm413, %v417, %v416
        %v419 = vstv %s340
        %v420 = vsel %vm412, %v419, %v418
        %421 = vst [vmem:[%s202] sm:$0x1] %v420
        %s422 = sand.u32 %s99, 1
        %s423 = scalar_lea.sflag [#allocation6], %s422
        %s424 = sand.u32 %s99, 1
        %s425 = scalar_lea.vmem [#allocation7], %s424
        // Predicated region
        $region33: #{tpu_custom_call.1} parent=27 // pred_check
          %p426 = pneg %p109
        $region34: #{tpu_custom_call.1} parent=27 // pred_check_branch
          %428 = sbr.rel (%p426) target = $region36
        $region35: #{tpu_custom_call.1} parent=27 // pred_region
          %s430 = ssub.s32 16, 16
          %431 = vsyncadd %s423, %s430
          %s432 = sadd.s32 %s26, %s25
          %s433 = smul.addr %s432, 16
          %s434 = scalar_lea.hbm %s3, %s433
          %s436 = sshll.u32 %s425, 4
          %s437 = int_to_ptr.vmem [resolvable:$true] %s436
          %439 = dma.vmem_to_hbm [thread:$0]  %s437, 16, %s434, %s423
        $region36: #{tpu_custom_call.1} parent=27 // pred_fallthru
          _
      $region28: #{tpu_custom_call.1} parent=5 // pred_fallthru
        _
      %p440 = scmp.le.s32.totalorder 2, %s16
      // Predicated region
      $region37: #{tpu_custom_call.1} parent=5 // pred_check
        %p441 = pneg %p440
      $region38: #{tpu_custom_call.1} parent=5 // pred_check_branch
        %443 = sbr.rel (%p441) target = $region40
      $region39: #{tpu_custom_call.1} parent=5 // pred_region
        %s444 = ssub.s32 %s16, 2
        // Predicated region
        $region41: #{tpu_custom_call.1} parent=39 // pred_check
          %p445 = pneg %p115
        $region42: #{tpu_custom_call.1} parent=39 // pred_check_branch
          %447 = sbr.rel (%p445) target = $region44
        $region43: #{tpu_custom_call.1} parent=39 // pred_region
          %s448 = sand.u32 %s100, 1
          %s449 = scalar_lea.sflag [#allocation6], %s448
          %s450 = sand.u32 %s100, 1
          %s451 = scalar_lea.vmem [#allocation7], %s450
          %452 = dma.done %s449, 16
        $region44: #{tpu_custom_call.1} parent=39 // pred_fallthru
          _
      $region40: #{tpu_custom_call.1} parent=5 // pred_fallthru
        _
    $region6: #{tpu_custom_call.1} parent=1 // loop_footer
      %s20 = sadd.s32 1, %s16
    $region7: #{tpu_custom_call.1} parent=1 // loop_footer_branch
      %15 = sbr.rel target = $region3
    $region8: #{tpu_custom_call.1} parent=1 // loop_exit
      _
    %453 = vsyncpa [#allocation5], 1
    %s454 = scalar_lea.sflag [#allocation5], 1
    %455 = vsyncpa %s454, 1
    %456 = vsyncpa [#allocation6], 1
    %s457 = scalar_lea.sflag [#allocation6], 1
    %458 = vsyncpa %s457, 1

</llo_original>
